<compile_context>
chip_gen: v5e
topology: v5e:2x2
jax: 0.10.0
libtpu: 0.0.40
codegen_flags: <defaults>
</compile_context>

<pallas_src>
import functools

import numpy as np
import jax
import jax.numpy as jnp
from jax.experimental import pallas as pl
from jax.experimental.pallas import tpu as pltpu


# ----------------------------------------------------------------------------
# Fused kernel: loss_labels (weighted BCE) + cardinality + box L1 + GIoU
# ----------------------------------------------------------------------------
def _fused_criterion_kernel(logits_ref, lg_ref, tl_ref, mlog_ref, mlab_ref,
                            mask_ref, sbox_ref, tbox_ref, out_ref, acc_ref,
                            *, weight, inv_elems, inv_batch, inv_nb):
    step = pl.program_id(0)
    nsteps = pl.num_programs(0)

    @pl.when(step == 0)
    def _init():
        acc_ref[...] = jnp.zeros_like(acc_ref)

    # ---- bulk pass over ALL logits: BCE(x, t=0, w=1) = clamped softplus(x) ----
    # (padding value -1e4 contributes exactly 0)
    x = logits_ref[...].astype(jnp.float32)                     # (TR, 128)
    sp = jnp.maximum(x, 0.0) + jnp.log(1.0 + jnp.exp(-jnp.abs(x)))
    sp = jnp.minimum(sp, 100.0)                                 # torch clamps log at -100
    acc_ref[...] += jnp.sum(sp, axis=0, keepdims=True)          # (1, 128) partials

    @pl.when(step == nsteps - 1)
    def _finalize():
        bulk = jnp.sum(acc_ref[...])

        # --- matched-row correction:  + w*BCE(x, t)  -  BCE(x, 0) ---
        xm = mlog_ref[...].astype(jnp.float32)                  # (C, Mpad)
        tm = mlab_ref[...].astype(jnp.float32)                  # (C, Mpad)
        mm = mask_ref[...].astype(jnp.float32)                  # (1, Mpad)
        spm = jnp.maximum(xm, 0.0) + jnp.log(1.0 + jnp.exp(-jnp.abs(xm)))
        neg_t = jnp.minimum(spm, 100.0)        # -log(1 - sigmoid(x)), clamped
        pos_t = jnp.minimum(spm - xm, 100.0)   # -log(sigmoid(x)),     clamped
        bce_m = tm * pos_t + (1.0 - tm) * neg_t
        corr = jnp.sum((weight * bce_m - neg_t) * mm)
        loss_ce = (bulk + corr) * inv_elems

        # --- cardinality error (argmax != last class), no iota needed ---
        lg = lg_ref[...].astype(jnp.float32)                    # (B, Q, C)
        C = lg.shape[-1]
        rest_max = jnp.max(lg[..., :C - 1], axis=-1, keepdims=True)   # (B, Q, 1)
        last = lg[..., C - 1:C]                                       # (B, Q, 1)
        not_last = (rest_max >= last).astype(jnp.float32)             # (B, Q, 1)
        card_pred = jnp.sum(not_last, axis=1)                         # (B, 1)
        tl = tl_ref[...].astype(jnp.float32)                          # (B, 1)
        card_err = jnp.sum(jnp.abs(card_pred - tl)) * inv_batch

        # --- boxes (lane-major [4, Mpad]): L1 + GIoU, masked & eps-guarded ---
        src = sbox_ref[...].astype(jnp.float32)                 # (4, Mpad) cxcywh
        tgt = tbox_ref[...].astype(jnp.float32)
        loss_bbox = jnp.sum(jnp.abs(src - tgt) * mm) * inv_nb

        def to_xyxy(b):
            cx, cy, bw, bh = b[0:1, :], b[1:2, :], b[2:3, :], b[3:4, :]
            return cx - 0.5 * bw, cy - 0.5 * bh, cx + 0.5 * bw, cy + 0.5 * bh

        sx1, sy1, sx2, sy2 = to_xyxy(src)
        tx1, ty1, tx2, ty2 = to_xyxy(tgt)
        area_s = (sx2 - sx1) * (sy2 - sy1)
        area_t = (tx2 - tx1) * (ty2 - ty1)
        ix1 = jnp.maximum(sx1, tx1)
        iy1 = jnp.maximum(sy1, ty1)
        ix2 = jnp.minimum(sx2, tx2)
        iy2 = jnp.minimum(sy2, ty2)
        inter = jnp.maximum(ix2 - ix1, 0.0) * jnp.maximum(iy2 - iy1, 0.0)
        union = area_s + area_t - inter
        eps = 1e-7
        iou = inter / jnp.maximum(union, eps)
        cx1 = jnp.minimum(sx1, tx1)
        cy1 = jnp.minimum(sy1, ty1)
        cx2 = jnp.maximum(sx2, tx2)
        cy2 = jnp.maximum(sy2, ty2)
        carea = (cx2 - cx1) * (cy2 - cy1)
        giou = iou - (carea - union) / jnp.maximum(carea, eps)
        loss_giou = jnp.sum(jnp.where(mm > 0.0, 1.0 - giou, 0.0)) * inv_nb

        # pack the 4 scalars into one lane-dense (1, 128) output row
        lane = jax.lax.broadcasted_iota(jnp.int32, (1, 128), 1)
        vals = jnp.where(lane == 0, loss_ce, 0.0)
        vals = jnp.where(lane == 1, card_err, vals)
        vals = jnp.where(lane == 2, loss_bbox, vals)
        vals = jnp.where(lane == 3, loss_giou, vals)
        out_ref[...] = vals.astype(jnp.float32)


def _run_fused_criterion(logits_lanes, logits_bqc, tgt_lens, mlog_t, mlab_t,
                         mask_row, sbox_t, tbox_t, *, weight_eff, inv_num_boxes,
                         tile_rows):
    B, Q, C = logits_bqc.shape
    R = logits_lanes.shape[0]
    Mpad = mask_row.shape[1]
    grid = (R // tile_rows,)

    kernel = functools.partial(
        _fused_criterion_kernel,
        weight=float(weight_eff),
        inv_elems=1.0 / float(B * Q * C),
        inv_batch=1.0 / float(B),
        inv_nb=float(inv_num_boxes),
    )

    out = pl.pallas_call(
        kernel,
        out_shape=jax.ShapeDtypeStruct((1, 128), jnp.float32),
        grid=grid,
        in_specs=[
            pl.BlockSpec((tile_rows, 128), lambda i: (i, 0)),   # lane-dense logits
            pl.BlockSpec((B, Q, C), lambda i: (0, 0, 0)),        # logits for cardinality
            pl.BlockSpec((B, 1), lambda i: (0, 0)),              # target lengths
            pl.BlockSpec((C, Mpad), lambda i: (0, 0)),           # matched logits^T
            pl.BlockSpec((C, Mpad), lambda i: (0, 0)),           # matched labels^T
            pl.BlockSpec((1, Mpad), lambda i: (0, 0)),           # matched-row mask
            pl.BlockSpec((4, Mpad), lambda i: (0, 0)),           # matched src boxes^T
            pl.BlockSpec((4, Mpad), lambda i: (0, 0)),           # matched tgt boxes^T
        ],
        out_specs=pl.BlockSpec((1, 128), lambda i: (0, 0)),
        scratch_shapes=[pltpu.VMEM((1, 128), jnp.float32)],
        # The grid axis carries a scalar accumulator, so it must be "arbitrary".
        # (For v7x dual-TC parallelism one would emit per-tile partials instead.)
        compiler_params=pltpu.CompilerParams(
            dimension_semantics=("arbitrary",),
            vmem_limit_bytes=32 * 1024 * 1024),   # sized well within v7x's 64 MiB VMEM
    )(logits_lanes, logits_bqc, tgt_lens, mlog_t, mlab_t, mask_row, sbox_t, tbox_t)
    return out[0, 0], out[0, 1], out[0, 2], out[0, 3]


# ----------------------------------------------------------------------------
# Criterion wrapper (JAX glue around the fused Pallas kernel)
# ----------------------------------------------------------------------------
class SetCriterionAVAPallas:
    def __init__(self, weight, num_classes, num_queries, eos_coef, losses,
                 evaluation=False):
        self.weight = float(weight)
        self.num_classes = num_classes
        self.num_queries = num_queries
        self.eos_coef = float(eos_coef)
        self.losses = losses
        self.evaluation = evaluation
        # registered buffer (kept for fidelity; not used in this forward path)
        self.empty_weight = jnp.ones((3,), jnp.float32).at[-1].set(self.eos_coef)

    @staticmethod
    def _get_src_permutation_idx(indices):
        batch_idx = np.concatenate(
            [np.full_like(np.asarray(src), i) for i, (src, _) in enumerate(indices)])
        src_idx = np.concatenate([np.asarray(src) for src, _ in indices])
        return batch_idx, src_idx

    def forward(self, outputs, targets, indices):
        # TODO(synk): the Hungarian matcher is an external module; deterministic
        # matching indices are supplied explicitly instead of being computed here.
        pred_logits = outputs['pred_logits']        # [B, Q, C] (f32 or bf16)
        pred_boxes = outputs['pred_boxes']          # [B, Q, 4]
        B, Q, C = pred_logits.shape

        num_boxes = float(sum(int(t['labels'].shape[0]) for t in targets))
        num_boxes = max(num_boxes, 1.0)             # clamp >= 1 (standard DETR)
        batch_idx, src_idx = self._get_src_permutation_idx(indices)
        M = int(batch_idx.shape[0])

        # ----- glue: gather matched rows (O(M), tiny) -----
        if M > 0:
            target_classes_o = jnp.concatenate(
                [t['labels'][np.asarray(J)] for t, (_, J) in zip(targets, indices)],
                axis=0).astype(jnp.float32)                          # [M, C]
            matched_logits = pred_logits[batch_idx, src_idx].astype(jnp.float32)  # [M, C]
            src_boxes = pred_boxes[batch_idx, src_idx].astype(jnp.float32)        # [M, 4]
            tgt_boxes = jnp.concatenate(
                [t['boxes'][np.asarray(i)] for t, (_, i) in zip(targets, indices)],
                axis=0)[:, 1:].astype(jnp.float32)                   # drop col 0 -> [M, 4]
        else:
            target_classes_o = jnp.zeros((0, C), jnp.float32)
            matched_logits = jnp.zeros((0, C), jnp.float32)
            src_boxes = jnp.zeros((0, 4), jnp.float32)
            tgt_boxes = jnp.zeros((0, 4), jnp.float32)

        # lane-major padding: boxes/classes on lanes, coords/classes on sublanes
        Mpad = max(128, int(np.ceil(max(M, 1) / 128.0)) * 128)
        pad = Mpad - M
        mlog_t = jnp.pad(matched_logits.T, ((0, 0), (0, pad)))       # [C, Mpad]
        mlab_t = jnp.pad(target_classes_o.T, ((0, 0), (0, pad)))     # [C, Mpad]
        dummy = jnp.tile(jnp.asarray([[0.5], [0.5], [0.2], [0.2]], jnp.float32),
                         (1, pad))
        sbox_t = jnp.concatenate([src_boxes.T, dummy], axis=1)       # [4, Mpad]
        tbox_t = jnp.concatenate([tgt_boxes.T, dummy], axis=1)       # [4, Mpad]
        mask_row = jnp.concatenate([jnp.ones((1, M), jnp.float32),
                                    jnp.zeros((1, pad), jnp.float32)], axis=1)

        tgt_lens = jnp.asarray([[float(t['labels'].shape[0])] for t in targets],
                               jnp.float32)                          # [B, 1]

        # ----- lane-dense flatten of logits for the bulk BCE pass -----
        total = B * Q * C
        rows = -(-total // 128)
        rows16 = max(16, ((rows + 15) // 16) * 16)                   # bf16-safe sublanes
        tile_rows = min(512, rows16)
        r_pad = ((rows16 + tile_rows - 1) // tile_rows) * tile_rows
        flat = jnp.pad(pred_logits.reshape(-1), (0, r_pad * 128 - total),
                       constant_values=-1e4)                         # pad contributes 0
        logits_lanes = flat.reshape(r_pad, 128)

        weight_eff = 1.0 if self.evaluation else self.weight
        loss_ce, card_err, loss_bbox, loss_giou = _run_fused_criterion(
            logits_lanes, pred_logits, tgt_lens, mlog_t, mlab_t, mask_row,
            sbox_t, tbox_t, weight_eff=weight_eff,
            inv_num_boxes=1.0 / num_boxes, tile_rows=tile_rows)

        # class_error (logging only).
        # TODO(synk): accuracy_sigmoid is defined outside this module; using a
        # per-element thresholded-sigmoid accuracy as its stand-in (plain JAX, O(M)).
        if M > 0:
            pred_bin = (jax.nn.sigmoid(matched_logits) > 0.5).astype(jnp.float32)
            acc = jnp.mean((pred_bin == target_classes_o).astype(jnp.float32)) * 100.0
            class_error = 100.0 - acc
        else:
            class_error = jnp.float32(0.0)

        losses = {}
        if 'labels' in self.losses:
            losses['loss_ce'] = loss_ce
            losses['class_error'] = class_error
        if 'cardinality' in self.losses:
            losses['cardinality_error'] = card_err
        if 'boxes' in self.losses:
            losses['loss_bbox'] = loss_bbox
            losses['loss_giou'] = loss_giou
        # TODO(synk): 'masks' loss (bilinear interpolate + focal/dice on nested
        # tensors) is not in the configured loss list and is not implemented.
        return losses


# ----------------------------------------------------------------------------
if __name__ == "__main__":
    key = jax.random.PRNGKey(0)
    B, Q, C = 2, 8, 4           # batch, queries, classes

    k1, k2, k3, k4, k5 = jax.random.split(key, 5)
    pred_logits = jax.random.normal(k1, (B, Q, C), jnp.float32)
    pred_boxes = jax.nn.sigmoid(jax.random.normal(k2, (B, Q, 4), jnp.float32)) * 0.4 + 0.2
    outputs = {'pred_logits': pred_logits, 'pred_boxes': pred_boxes}

    n0, n1 = 3, 2
    labels0 = (jax.random.uniform(k3, (n0, C)) > 0.5).astype(jnp.float32)
    labels1 = (jax.random.uniform(k4, (n1, C)) > 0.5).astype(jnp.float32)

    def mk_boxes(k, n):
        b = jax.random.uniform(k, (n, 4), minval=0.2, maxval=0.4)     # cx,cy,w,h
        frame = jnp.zeros((n, 1), jnp.float32)                        # extra col 0
        return jnp.concatenate([frame, b], axis=1)                    # [n, 5]

    kb0, kb1 = jax.random.split(k5)
    targets = [
        {'labels': labels0, 'boxes': mk_boxes(kb0, n0)},
        {'labels': labels1, 'boxes': mk_boxes(kb1, n1)},
    ]
    # deterministic (identity) matching: target j <-> query j
    indices = [(np.arange(n0), np.arange(n0)), (np.arange(n1), np.arange(n1))]

    criterion = SetCriterionAVAPallas(weight=5.0, num_classes=C, num_queries=Q,
                                      eos_coef=0.1,
                                      losses=['labels', 'cardinality', 'boxes'])
    losses = criterion.forward(outputs, targets, indices)
    losses = jax.tree_util.tree_map(jax.block_until_ready, losses)
    print("KERNEL_OK")
</pallas_src>

<mosaic_0001>
module attributes {stable_mosaic.version = 11 : i64} {
  func.func @_fused_criterion_kernel(%arg0: i32, %arg1: memref<16x128xf32, #tpu.memory_space<vmem>>, %arg2: memref<2x8x4xf32, #tpu.memory_space<vmem>>, %arg3: memref<2x1xf32, #tpu.memory_space<vmem>>, %arg4: memref<4x128xf32, #tpu.memory_space<vmem>>, %arg5: memref<4x128xf32, #tpu.memory_space<vmem>>, %arg6: memref<1x128xf32, #tpu.memory_space<vmem>>, %arg7: memref<4x128xf32, #tpu.memory_space<vmem>>, %arg8: memref<4x128xf32, #tpu.memory_space<vmem>>, %arg9: memref<1x128xf32, #tpu.memory_space<vmem>>, %arg10: memref<1x128xf32, #tpu.memory_space<vmem>>) attributes {dimension_semantics = [#tpu.dimension_semantics<arbitrary>], iteration_bounds = array<i64: 1>, scalar_prefetch = 0 : i64, scratch_operands = 1 : i64, tpu.core_type = #tpu.core_type<tc>, window_params = [{transform_indices = @transform_0, window_bounds = array<i64: 16, 128>}, {pipeline_mode = #tpu.pipeline_mode<synchronous>, transform_indices = @transform_1, window_bounds = array<i64: 2, 8, 4>}, {pipeline_mode = #tpu.pipeline_mode<synchronous>, transform_indices = @transform_2, window_bounds = array<i64: 2, 1>}, {pipeline_mode = #tpu.pipeline_mode<synchronous>, transform_indices = @transform_3, window_bounds = array<i64: 4, 128>}, {pipeline_mode = #tpu.pipeline_mode<synchronous>, transform_indices = @transform_4, window_bounds = array<i64: 4, 128>}, {pipeline_mode = #tpu.pipeline_mode<synchronous>, transform_indices = @transform_5, window_bounds = array<i64: 1, 128>}, {pipeline_mode = #tpu.pipeline_mode<synchronous>, transform_indices = @transform_6, window_bounds = array<i64: 4, 128>}, {pipeline_mode = #tpu.pipeline_mode<synchronous>, transform_indices = @transform_7, window_bounds = array<i64: 4, 128>}, {pipeline_mode = #tpu.pipeline_mode<synchronous>, transform_indices = @transform_8, window_bounds = array<i64: 1, 128>}]} {
    %c0_i32 = arith.constant 0 : i32
    %0 = arith.cmpi eq, %arg0, %c0_i32 : i32
    %1 = arith.extui %0 : i1 to i32
    %c0_i32_0 = arith.constant 0 : i32
    %2 = arith.cmpi ne, %1, %c0_i32_0 : i32
    scf.if %2 {
      %cst_12 = arith.constant 0.000000e+00 : f32
      %24 = vector.broadcast %cst_12 : f32 to vector<1x128xf32>
      %c0_13 = arith.constant 0 : index
      %c0_14 = arith.constant 0 : index
      %25 = vector.load %arg10[%c0_13, %c0_14] : memref<1x128xf32, #tpu.memory_space<vmem>>, vector<1x128xf32>
      tpu.vector_store %arg10[%c0_13, %c0_14], %24 {strides = array<i32>} : memref<1x128xf32, #tpu.memory_space<vmem>>, vector<1x128xf32>,
    } else {
    }
    %c0 = arith.constant 0 : index
    %c0_1 = arith.constant 0 : index
    %3 = vector.load %arg1[%c0, %c0_1] : memref<16x128xf32, #tpu.memory_space<vmem>>, vector<16x128xf32>
    %cst = arith.constant 0.000000e+00 : f32
    %4 = vector.broadcast %cst : f32 to vector<16x128xf32>
    %5 = arith.maximumf %3, %4 : vector<16x128xf32>
    %6 = math.absf %3 : vector<16x128xf32>
    %cst_2 = arith.constant 0.000000e+00 : f32
    %7 = vector.broadcast %cst_2 : f32 to vector<16x128xf32>
    %8 = arith.subf %7, %6 : vector<16x128xf32>
    %9 = math.exp %8 : vector<16x128xf32>
    %cst_3 = arith.constant 1.000000e+00 : f32
    %10 = vector.broadcast %cst_3 : f32 to vector<16x128xf32>
    %11 = arith.addf %10, %9 : vector<16x128xf32>
    %12 = math.log %11 : vector<16x128xf32>
    %13 = arith.addf %5, %12 : vector<16x128xf32>
    %cst_4 = arith.constant 1.000000e+02 : f32
    %14 = vector.broadcast %cst_4 : f32 to vector<16x128xf32>
    %15 = arith.minimumf %13, %14 : vector<16x128xf32>
    %c0_5 = arith.constant 0 : index
    %c0_6 = arith.constant 0 : index
    %16 = vector.load %arg10[%c0_5, %c0_6] : memref<1x128xf32, #tpu.memory_space<vmem>>, vector<1x128xf32>
    %cst_7 = arith.constant dense<0.000000e+00> : vector<128xf32>
    %17 = vector.multi_reduction <add>, %15, %cst_7 [0] : vector<16x128xf32> to vector<128xf32>
    %18 = vector.shape_cast %17 : vector<128xf32> to vector<1x128xf32>
    %19 = arith.addf %16, %18 : vector<1x128xf32>
    %c0_8 = arith.constant 0 : index
    %c0_9 = arith.constant 0 : index
    %20 = vector.load %arg10[%c0_8, %c0_9] : memref<1x128xf32, #tpu.memory_space<vmem>>, vector<1x128xf32>
    tpu.vector_store %arg10[%c0_8, %c0_9], %19 {strides = array<i32>} : memref<1x128xf32, #tpu.memory_space<vmem>>, vector<1x128xf32>,
    %c0_i32_10 = arith.constant 0 : i32
    %21 = arith.cmpi eq, %arg0, %c0_i32_10 : i32
    %22 = arith.extui %21 : i1 to i32
    %c0_i32_11 = arith.constant 0 : i32
    %23 = arith.cmpi ne, %22, %c0_i32_11 : i32
    scf.if %23 {
      %c0_12 = arith.constant 0 : index
      %c0_13 = arith.constant 0 : index
      %24 = vector.load %arg10[%c0_12, %c0_13] : memref<1x128xf32, #tpu.memory_space<vmem>>, vector<1x128xf32>
      %25 = vector.shape_cast %24 : vector<1x128xf32> to vector<1x1x128xf32>
      %cst_14 = arith.constant dense<0.000000e+00> : vector<1xf32>
      %26 = vector.multi_reduction <add>, %25, %cst_14 [1, 2] : vector<1x1x128xf32> to vector<1xf32>
      %27 = vector.shape_cast %26 : vector<1xf32> to vector<1x1x1xf32>
      %28 = vector.extract %27[0, 0, 0] : f32 from vector<1x1x1xf32>
      %c0_15 = arith.constant 0 : index
      %c0_16 = arith.constant 0 : index
      %29 = vector.load %arg4[%c0_15, %c0_16] : memref<4x128xf32, #tpu.memory_space<vmem>>, vector<4x128xf32>
      %c0_17 = arith.constant 0 : index
      %c0_18 = arith.constant 0 : index
      %30 = vector.load %arg5[%c0_17, %c0_18] : memref<4x128xf32, #tpu.memory_space<vmem>>, vector<4x128xf32>
      %c0_19 = arith.constant 0 : index
      %c0_20 = arith.constant 0 : index
      %31 = vector.load %arg6[%c0_19, %c0_20] : memref<1x128xf32, #tpu.memory_space<vmem>>, vector<1x128xf32>
      %cst_21 = arith.constant 0.000000e+00 : f32
      %32 = vector.broadcast %cst_21 : f32 to vector<4x128xf32>
      %33 = arith.maximumf %29, %32 : vector<4x128xf32>
      %34 = math.absf %29 : vector<4x128xf32>
      %cst_22 = arith.constant 0.000000e+00 : f32
      %35 = vector.broadcast %cst_22 : f32 to vector<4x128xf32>
      %36 = arith.subf %35, %34 : vector<4x128xf32>
      %37 = math.exp %36 : vector<4x128xf32>
      %cst_23 = arith.constant 1.000000e+00 : f32
      %38 = vector.broadcast %cst_23 : f32 to vector<4x128xf32>
      %39 = arith.addf %38, %37 : vector<4x128xf32>
      %40 = math.log %39 : vector<4x128xf32>
      %41 = arith.addf %33, %40 : vector<4x128xf32>
      %cst_24 = arith.constant 1.000000e+02 : f32
      %42 = vector.broadcast %cst_24 : f32 to vector<4x128xf32>
      %43 = arith.minimumf %41, %42 : vector<4x128xf32>
      %44 = arith.subf %41, %29 : vector<4x128xf32>
      %cst_25 = arith.constant 1.000000e+02 : f32
      %45 = vector.broadcast %cst_25 : f32 to vector<4x128xf32>
      %46 = arith.minimumf %44, %45 : vector<4x128xf32>
      %47 = arith.mulf %30, %46 : vector<4x128xf32>
      %cst_26 = arith.constant 1.000000e+00 : f32
      %48 = vector.broadcast %cst_26 : f32 to vector<4x128xf32>
      %49 = arith.subf %48, %30 : vector<4x128xf32>
      %50 = arith.mulf %49, %43 : vector<4x128xf32>
      %51 = arith.addf %47, %50 : vector<4x128xf32>
      %cst_27 = arith.constant 5.000000e+00 : f32
      %52 = vector.broadcast %cst_27 : f32 to vector<4x128xf32>
      %53 = arith.mulf %52, %51 : vector<4x128xf32>
      %54 = arith.subf %53, %43 : vector<4x128xf32>
      %55 = vector.broadcast %31 : vector<1x128xf32> to vector<4x128xf32>
      %56 = arith.mulf %54, %55 : vector<4x128xf32>
      %57 = vector.shape_cast %56 : vector<4x128xf32> to vector<1x4x128xf32>
      %cst_28 = arith.constant dense<0.000000e+00> : vector<1xf32>
      %58 = vector.multi_reduction <add>, %57, %cst_28 [1, 2] : vector<1x4x128xf32> to vector<1xf32>
      %59 = vector.shape_cast %58 : vector<1xf32> to vector<1x1x1xf32>
      %60 = vector.extract %59[0, 0, 0] : f32 from vector<1x1x1xf32>
      %61 = arith.addf %28, %60 : f32
      %cst_29 = arith.constant 1.562500e-02 : f32
      %62 = arith.mulf %61, %cst_29 : f32
      %c0_30 = arith.constant 0 : index
      %c0_31 = arith.constant 0 : index
      %c0_32 = arith.constant 0 : index
      %63 = vector.load %arg2[%c0_30, %c0_31, %c0_32] : memref<2x8x4xf32, #tpu.memory_space<vmem>>, vector<2x8x4xf32>
      %64 = vector.extract_strided_slice %63 {offsets = [0, 0, 0], sizes = [2, 8, 3], strides = [1, 1, 1]} : vector<2x8x4xf32> to vector<2x8x3xf32>
      %cst_33 = arith.constant dense<0xFF800000> : vector<2x8xf32>
      %65 = vector.multi_reduction <maximumf>, %64, %cst_33 [2] : vector<2x8x3xf32> to vector<2x8xf32>
      %66 = vector.shape_cast %65 : vector<2x8xf32> to vector<2x8x1xf32>
      %67 = vector.extract_strided_slice %63 {offsets = [0, 0, 3], sizes = [2, 8, 1], strides = [1, 1, 1]} : vector<2x8x4xf32> to vector<2x8x1xf32>
      %68 = arith.cmpf oge, %66, %67 : vector<2x8x1xf32>
      %69 = arith.extui %68 : vector<2x8x1xi1> to vector<2x8x1xi32>
      %70 = arith.sitofp %69 : vector<2x8x1xi32> to vector<2x8x1xf32>
      %cst_34 = arith.constant dense<0.000000e+00> : vector<2x1xf32>
      %71 = vector.multi_reduction <add>, %70, %cst_34 [1] : vector<2x8x1xf32> to vector<2x1xf32>
      %c0_35 = arith.constant 0 : index
      %c0_36 = arith.constant 0 : index
      %72 = vector.load %arg3[%c0_35, %c0_36] : memref<2x1xf32, #tpu.memory_space<vmem>>, vector<2x1xf32>
      %73 = arith.subf %71, %72 : vector<2x1xf32>
      %74 = math.absf %73 : vector<2x1xf32>
      %75 = vector.shape_cast %74 : vector<2x1xf32> to vector<1x2x1xf32>
      %cst_37 = arith.constant dense<0.000000e+00> : vector<1xf32>
      %76 = vector.multi_reduction <add>, %75, %cst_37 [1, 2] : vector<1x2x1xf32> to vector<1xf32>
      %77 = vector.shape_cast %76 : vector<1xf32> to vector<1x1x1xf32>
      %78 = vector.extract %77[0, 0, 0] : f32 from vector<1x1x1xf32>
      %cst_38 = arith.constant 5.000000e-01 : f32
      %79 = arith.mulf %78, %cst_38 : f32
      %c0_39 = arith.constant 0 : index
      %c0_40 = arith.constant 0 : index
      %80 = vector.load %arg7[%c0_39, %c0_40] : memref<4x128xf32, #tpu.memory_space<vmem>>, vector<4x128xf32>
      %c0_41 = arith.constant 0 : index
      %c0_42 = arith.constant 0 : index
      %81 = vector.load %arg8[%c0_41, %c0_42] : memref<4x128xf32, #tpu.memory_space<vmem>>, vector<4x128xf32>
      %82 = arith.subf %80, %81 : vector<4x128xf32>
      %83 = math.absf %82 : vector<4x128xf32>
      %84 = vector.broadcast %31 : vector<1x128xf32> to vector<4x128xf32>
      %85 = arith.mulf %83, %84 : vector<4x128xf32>
      %86 = vector.shape_cast %85 : vector<4x128xf32> to vector<1x4x128xf32>
      %cst_43 = arith.constant dense<0.000000e+00> : vector<1xf32>
      %87 = vector.multi_reduction <add>, %86, %cst_43 [1, 2] : vector<1x4x128xf32> to vector<1xf32>
      %88 = vector.shape_cast %87 : vector<1xf32> to vector<1x1x1xf32>
      %89 = vector.extract %88[0, 0, 0] : f32 from vector<1x1x1xf32>
      %cst_44 = arith.constant 2.000000e-01 : f32
      %90 = arith.mulf %89, %cst_44 : f32
      %91 = vector.extract_strided_slice %80 {offsets = [0, 0], sizes = [1, 128], strides = [1, 1]} : vector<4x128xf32> to vector<1x128xf32>
      %92 = vector.extract_strided_slice %80 {offsets = [1, 0], sizes = [1, 128], strides = [1, 1]} : vector<4x128xf32> to vector<1x128xf32>
      %93 = vector.extract_strided_slice %80 {offsets = [2, 0], sizes = [1, 128], strides = [1, 1]} : vector<4x128xf32> to vector<1x128xf32>
      %94 = vector.extract_strided_slice %80 {offsets = [3, 0], sizes = [1, 128], strides = [1, 1]} : vector<4x128xf32> to vector<1x128xf32>
      %cst_45 = arith.constant 5.000000e-01 : f32
      %95 = vector.broadcast %cst_45 : f32 to vector<1x128xf32>
      %96 = arith.mulf %95, %93 : vector<1x128xf32>
      %97 = arith.subf %91, %96 : vector<1x128xf32>
      %cst_46 = arith.constant 5.000000e-01 : f32
      %98 = vector.broadcast %cst_46 : f32 to vector<1x128xf32>
      %99 = arith.mulf %98, %94 : vector<1x128xf32>
      %100 = arith.subf %92, %99 : vector<1x128xf32>
      %cst_47 = arith.constant 5.000000e-01 : f32
      %101 = vector.broadcast %cst_47 : f32 to vector<1x128xf32>
      %102 = arith.mulf %101, %93 : vector<1x128xf32>
      %103 = arith.addf %91, %102 : vector<1x128xf32>
      %cst_48 = arith.constant 5.000000e-01 : f32
      %104 = vector.broadcast %cst_48 : f32 to vector<1x128xf32>
      %105 = arith.mulf %104, %94 : vector<1x128xf32>
      %106 = arith.addf %92, %105 : vector<1x128xf32>
      %107 = vector.extract_strided_slice %81 {offsets = [0, 0], sizes = [1, 128], strides = [1, 1]} : vector<4x128xf32> to vector<1x128xf32>
      %108 = vector.extract_strided_slice %81 {offsets = [1, 0], sizes = [1, 128], strides = [1, 1]} : vector<4x128xf32> to vector<1x128xf32>
      %109 = vector.extract_strided_slice %81 {offsets = [2, 0], sizes = [1, 128], strides = [1, 1]} : vector<4x128xf32> to vector<1x128xf32>
      %110 = vector.extract_strided_slice %81 {offsets = [3, 0], sizes = [1, 128], strides = [1, 1]} : vector<4x128xf32> to vector<1x128xf32>
      %cst_49 = arith.constant 5.000000e-01 : f32
      %111 = vector.broadcast %cst_49 : f32 to vector<1x128xf32>
      %112 = arith.mulf %111, %109 : vector<1x128xf32>
      %113 = arith.subf %107, %112 : vector<1x128xf32>
      %cst_50 = arith.constant 5.000000e-01 : f32
      %114 = vector.broadcast %cst_50 : f32 to vector<1x128xf32>
      %115 = arith.mulf %114, %110 : vector<1x128xf32>
      %116 = arith.subf %108, %115 : vector<1x128xf32>
      %cst_51 = arith.constant 5.000000e-01 : f32
      %117 = vector.broadcast %cst_51 : f32 to vector<1x128xf32>
      %118 = arith.mulf %117, %109 : vector<1x128xf32>
      %119 = arith.addf %107, %118 : vector<1x128xf32>
      %cst_52 = arith.constant 5.000000e-01 : f32
      %120 = vector.broadcast %cst_52 : f32 to vector<1x128xf32>
      %121 = arith.mulf %120, %110 : vector<1x128xf32>
      %122 = arith.addf %108, %121 : vector<1x128xf32>
      %123 = arith.subf %103, %97 : vector<1x128xf32>
      %124 = arith.subf %106, %100 : vector<1x128xf32>
      %125 = arith.mulf %123, %124 : vector<1x128xf32>
      %126 = arith.subf %119, %113 : vector<1x128xf32>
      %127 = arith.subf %122, %116 : vector<1x128xf32>
      %128 = arith.mulf %126, %127 : vector<1x128xf32>
      %129 = arith.maximumf %97, %113 : vector<1x128xf32>
      %130 = arith.maximumf %100, %116 : vector<1x128xf32>
      %131 = arith.minimumf %103, %119 : vector<1x128xf32>
      %132 = arith.minimumf %106, %122 : vector<1x128xf32>
      %133 = arith.subf %131, %129 : vector<1x128xf32>
      %cst_53 = arith.constant 0.000000e+00 : f32
      %134 = vector.broadcast %cst_53 : f32 to vector<1x128xf32>
      %135 = arith.maximumf %133, %134 : vector<1x128xf32>
      %136 = arith.subf %132, %130 : vector<1x128xf32>
      %cst_54 = arith.constant 0.000000e+00 : f32
      %137 = vector.broadcast %cst_54 : f32 to vector<1x128xf32>
      %138 = arith.maximumf %136, %137 : vector<1x128xf32>
      %139 = arith.mulf %135, %138 : vector<1x128xf32>
      %140 = arith.addf %125, %128 : vector<1x128xf32>
      %141 = arith.subf %140, %139 : vector<1x128xf32>
      %cst_55 = arith.constant 1.000000e-07 : f32
      %142 = vector.broadcast %cst_55 : f32 to vector<1x128xf32>
      %143 = arith.maximumf %141, %142 : vector<1x128xf32>
      %144 = arith.divf %139, %143 : vector<1x128xf32>
      %145 = arith.minimumf %97, %113 : vector<1x128xf32>
      %146 = arith.minimumf %100, %116 : vector<1x128xf32>
      %147 = arith.maximumf %103, %119 : vector<1x128xf32>
      %148 = arith.maximumf %106, %122 : vector<1x128xf32>
      %149 = arith.subf %147, %145 : vector<1x128xf32>
      %150 = arith.subf %148, %146 : vector<1x128xf32>
      %151 = arith.mulf %149, %150 : vector<1x128xf32>
      %152 = arith.subf %151, %141 : vector<1x128xf32>
      %cst_56 = arith.constant 1.000000e-07 : f32
      %153 = vector.broadcast %cst_56 : f32 to vector<1x128xf32>
      %154 = arith.maximumf %151, %153 : vector<1x128xf32>
      %155 = arith.divf %152, %154 : vector<1x128xf32>
      %156 = arith.subf %144, %155 : vector<1x128xf32>
      %cst_57 = arith.constant 0.000000e+00 : f32
      %157 = vector.broadcast %cst_57 : f32 to vector<1x128xf32>
      %158 = arith.cmpf ogt, %31, %157 : vector<1x128xf32>
      %cst_58 = arith.constant 1.000000e+00 : f32
      %159 = vector.broadcast %cst_58 : f32 to vector<1x128xf32>
      %160 = arith.subf %159, %156 : vector<1x128xf32>
      %cst_59 = arith.constant 0.000000e+00 : f32
      %161 = vector.broadcast %cst_59 : f32 to vector<1x128xf32>
      %162 = arith.select %158, %160, %161 : vector<1x128xi1>, vector<1x128xf32>
      %163 = vector.shape_cast %162 : vector<1x128xf32> to vector<1x1x128xf32>
      %cst_60 = arith.constant dense<0.000000e+00> : vector<1xf32>
      %164 = vector.multi_reduction <add>, %163, %cst_60 [1, 2] : vector<1x1x128xf32> to vector<1xf32>
      %165 = vector.shape_cast %164 : vector<1xf32> to vector<1x1x1xf32>
      %166 = vector.extract %165[0, 0, 0] : f32 from vector<1x1x1xf32>
      %cst_61 = arith.constant 2.000000e-01 : f32
      %167 = arith.mulf %166, %cst_61 : f32
      %168 = tpu.iota {dimensions = array<i32: 1>} : vector<1x128xi32>
      %c0_i32_62 = arith.constant 0 : i32
      %169 = vector.broadcast %c0_i32_62 : i32 to vector<1x128xi32>
      %170 = arith.cmpi eq, %168, %169 : vector<1x128xi32>
      %cst_63 = arith.constant 0.000000e+00 : f32
      %171 = vector.broadcast %62 : f32 to vector<1x128xf32>
      %172 = vector.broadcast %cst_63 : f32 to vector<1x128xf32>
      %173 = arith.select %170, %171, %172 : vector<1x128xi1>, vector<1x128xf32>
      %c1_i32 = arith.constant 1 : i32
      %174 = vector.broadcast %c1_i32 : i32 to vector<1x128xi32>
      %175 = arith.cmpi eq, %168, %174 : vector<1x128xi32>
      %176 = vector.broadcast %79 : f32 to vector<1x128xf32>
      %177 = arith.select %175, %176, %173 : vector<1x128xi1>, vector<1x128xf32>
      %c2_i32 = arith.constant 2 : i32
      %178 = vector.broadcast %c2_i32 : i32 to vector<1x128xi32>
      %179 = arith.cmpi eq, %168, %178 : vector<1x128xi32>
      %180 = vector.broadcast %90 : f32 to vector<1x128xf32>
      %181 = arith.select %179, %180, %177 : vector<1x128xi1>, vector<1x128xf32>
      %c3_i32 = arith.constant 3 : i32
      %182 = vector.broadcast %c3_i32 : i32 to vector<1x128xi32>
      %183 = arith.cmpi eq, %168, %182 : vector<1x128xi32>
      %184 = vector.broadcast %167 : f32 to vector<1x128xf32>
      %185 = arith.select %183, %184, %181 : vector<1x128xi1>, vector<1x128xf32>
      %c0_64 = arith.constant 0 : index
      %c0_65 = arith.constant 0 : index
      %186 = vector.load %arg9[%c0_64, %c0_65] : memref<1x128xf32, #tpu.memory_space<vmem>>, vector<1x128xf32>
      tpu.vector_store %arg9[%c0_64, %c0_65], %185 {strides = array<i32>} : memref<1x128xf32, #tpu.memory_space<vmem>>, vector<1x128xf32>,
    } else {
    }
    return
  }
  func.func @transform_0(%arg0: i32) -> (i32, i32) {
    %c0_i32 = arith.constant 0 : i32
    %c0_i32_0 = arith.constant 0 : i32
    return %arg0, %c0_i32 : i32, i32
  }
  func.func @transform_1(%arg0: i32) -> (i32, i32, i32) {
    %c0_i32 = arith.constant 0 : i32
    %c0_i32_0 = arith.constant 0 : i32
    %c0_i32_1 = arith.constant 0 : i32
    %c0_i32_2 = arith.constant 0 : i32
    return %c0_i32, %c0_i32_0, %c0_i32_1 : i32, i32, i32
  }
  func.func @transform_2(%arg0: i32) -> (i32, i32) {
    %c0_i32 = arith.constant 0 : i32
    %c0_i32_0 = arith.constant 0 : i32
    %c0_i32_1 = arith.constant 0 : i32
    return %c0_i32, %c0_i32_0 : i32, i32
  }
  func.func @transform_3(%arg0: i32) -> (i32, i32) {
    %c0_i32 = arith.constant 0 : i32
    %c0_i32_0 = arith.constant 0 : i32
    %c0_i32_1 = arith.constant 0 : i32
    return %c0_i32, %c0_i32_0 : i32, i32
  }
  func.func @transform_4(%arg0: i32) -> (i32, i32) {
    %c0_i32 = arith.constant 0 : i32
    %c0_i32_0 = arith.constant 0 : i32
    %c0_i32_1 = arith.constant 0 : i32
    return %c0_i32, %c0_i32_0 : i32, i32
  }
  func.func @transform_5(%arg0: i32) -> (i32, i32) {
    %c0_i32 = arith.constant 0 : i32
    %c0_i32_0 = arith.constant 0 : i32
    %c0_i32_1 = arith.constant 0 : i32
    return %c0_i32, %c0_i32_0 : i32, i32
  }
  func.func @transform_6(%arg0: i32) -> (i32, i32) {
    %c0_i32 = arith.constant 0 : i32
    %c0_i32_0 = arith.constant 0 : i32
    %c0_i32_1 = arith.constant 0 : i32
    return %c0_i32, %c0_i32_0 : i32, i32
  }
  func.func @transform_7(%arg0: i32) -> (i32, i32) {
    %c0_i32 = arith.constant 0 : i32
    %c0_i32_0 = arith.constant 0 : i32
    %c0_i32_1 = arith.constant 0 : i32
    return %c0_i32, %c0_i32_0 : i32, i32
  }
  func.func @transform_8(%arg0: i32) -> (i32, i32) {
    %c0_i32 = arith.constant 0 : i32
    %c0_i32_0 = arith.constant 0 : i32
    %c0_i32_1 = arith.constant 0 : i32
    return %c0_i32, %c0_i32_0 : i32, i32
  }
}

</mosaic_0001>

<llo_original>
// kernel: tpu_custom_call.1
$region0: #{tpu_custom_call.1}
  #allocation0 [shape = 'u32[]', space=smem, size = 0x4, offset = 0x4, fixed_abs, tag = 'smem constant byte address 0x4 - core index']
  #allocation1 [shape = 'u32[72,128]{1,0:T(1,128)}', space=vmem, size = 0x9000, scoped, tag = 'internal scratch']
  #allocation2 [shape = 'f32[1,128]{1,0:T(1,128)}', space=vmem, size = 0x200, scoped, tag = 'scratch operand']
  %s0 = inlined_call_operand.vmem [shape: f32[16,128], index: 0, kind: input, shape index: {}]
  %s1 = inlined_call_operand.vmem [shape: f32[2,8,4], index: 1, kind: input, shape index: {}]
  %s2 = inlined_call_operand.vmem [shape: f32[2,1], index: 2, kind: input, shape index: {}]
  %s3 = inlined_call_operand.vmem [shape: f32[4,128], index: 3, kind: input, shape index: {}]
  %s4 = inlined_call_operand.vmem [shape: f32[4,128], index: 4, kind: input, shape index: {}]
  %s5 = inlined_call_operand.vmem [shape: f32[1,128], index: 5, kind: input, shape index: {}]
  %s6 = inlined_call_operand.vmem [shape: f32[4,128], index: 6, kind: input, shape index: {}]
  %s7 = inlined_call_operand.hbm [shape: f32[4,128], index: 7, kind: input, shape index: {}]
  %s8 = inlined_call_operand.hbm [shape: f32[1,128], index: 8, kind: output, shape index: {}]
  %s9 = sld [smem:[#allocation0]]
  $region54: #{tpu_custom_call.1} parent=0
    _
  %s11 = ssub.s32 1, %s9
  %s12 = scalar_select 0, %s11, %s9
  $region1: #{tpu_custom_call.1} parent=0
    #allocation3 [shape = 'u8[2048]{0}', space=vmem, size = 0x800, scoped, tag = 'input window, operand 7, single buffered']
    #allocation4 [shape = 's32[1]{0}', space=sflag, size = 0x4, scoped, tag = 'scoped memory for tpu_custom_call.1']
    #allocation5 [shape = 's32[1]{0}', space=sflag, size = 0x4, scoped, tag = 'scoped memory for tpu_custom_call.1']
    #allocation6 [shape = 'u8[512]{0}', space=vmem, size = 0x400, scoped, tag = 'output window, operand 0, single buffered']
    %13 = vsyncpa [#allocation4], 0
    %14 = vsyncpa [#allocation5], 0
    // Predicated region
    $region2: #{tpu_custom_call.1} parent=1 // pred_check
      _
    $region3: #{tpu_custom_call.1} parent=1 // pred_check_branch
      %16 = sbr.rel (0) target = $region5
    $region4: #{tpu_custom_call.1} parent=1 // pred_region
      _
    $region5: #{tpu_custom_call.1} parent=1 // pred_fallthru
      _
    // Predicated region
    $region6: #{tpu_custom_call.1} parent=1 // pred_check
      _
    $region7: #{tpu_custom_call.1} parent=1 // pred_check_branch
      %18 = sbr.rel (0) target = $region9
    $region8: #{tpu_custom_call.1} parent=1 // pred_region
      _
    $region9: #{tpu_custom_call.1} parent=1 // pred_fallthru
      _
    // Predicated region
    $region10: #{tpu_custom_call.1} parent=1 // pred_check
      _
    $region11: #{tpu_custom_call.1} parent=1 // pred_check_branch
      %20 = sbr.rel (0) target = $region13
    $region12: #{tpu_custom_call.1} parent=1 // pred_region
      _
    $region13: #{tpu_custom_call.1} parent=1 // pred_fallthru
      _
    // Predicated region
    $region14: #{tpu_custom_call.1} parent=1 // pred_check
      _
    $region15: #{tpu_custom_call.1} parent=1 // pred_check_branch
      %22 = sbr.rel (0) target = $region17
    $region16: #{tpu_custom_call.1} parent=1 // pred_region
      _
    $region17: #{tpu_custom_call.1} parent=1 // pred_fallthru
      _
    // Predicated region
    $region18: #{tpu_custom_call.1} parent=1 // pred_check
      _
    $region19: #{tpu_custom_call.1} parent=1 // pred_check_branch
      %24 = sbr.rel (0) target = $region21
    $region20: #{tpu_custom_call.1} parent=1 // pred_region
      _
    $region21: #{tpu_custom_call.1} parent=1 // pred_fallthru
      _
    // Predicated region
    $region22: #{tpu_custom_call.1} parent=1 // pred_check
      _
    $region23: #{tpu_custom_call.1} parent=1 // pred_check_branch
      %26 = sbr.rel (0) target = $region25
    $region24: #{tpu_custom_call.1} parent=1 // pred_region
      _
    $region25: #{tpu_custom_call.1} parent=1 // pred_fallthru
      _
    // Predicated region
    $region26: #{tpu_custom_call.1} parent=1 // pred_check
      _
    $region27: #{tpu_custom_call.1} parent=1 // pred_check_branch
      %28 = sbr.rel (0) target = $region29
    $region28: #{tpu_custom_call.1} parent=1 // pred_region
      _
    $region29: #{tpu_custom_call.1} parent=1 // pred_fallthru
      _
    // Predicated region
    $region30: #{tpu_custom_call.1} parent=1 // pred_check
      _
    $region31: #{tpu_custom_call.1} parent=1 // pred_check_branch
      %30 = sbr.rel (0) target = $region33
    $region32: #{tpu_custom_call.1} parent=1 // pred_region
      %32 = vsyncadd [#allocation4], 0
      %s34 = sshll.u32 %s7, 4
      %s35 = int_to_ptr.hbm [resolvable:$true] %s34
      %s36 = sshll.u32 [#allocation3], 4
      %s37 = int_to_ptr.vmem [resolvable:$true] %s36
      %39 = dma.hbm_to_vmem [thread:$0]  %s35, 64, %s37, [#allocation4]
    $region33: #{tpu_custom_call.1} parent=1 // pred_fallthru
      _
    // Predicated region
    $region34: #{tpu_custom_call.1} parent=1 // pred_check
      _
    $region35: #{tpu_custom_call.1} parent=1 // pred_check_branch
      %41 = sbr.rel (0) target = $region37
    $region36: #{tpu_custom_call.1} parent=1 // pred_region
      %43 = dma.done [#allocation4], 64
    $region37: #{tpu_custom_call.1} parent=1 // pred_fallthru
      _
    %p44 = scmp.eq.s32.totalorder 0, 0
    // Predicated region
    $region38: #{tpu_custom_call.1} parent=1 // pred_check
      %p45 = pneg %p44
    $region39: #{tpu_custom_call.1} parent=1 // pred_check_branch
      %47 = sbr.rel (%p45) target = $region41
    $region40: #{tpu_custom_call.1} parent=1 // pred_region
      %48 = vst [vmem:[#allocation2] sm:$0x1] 0.0
    $region41: #{tpu_custom_call.1} parent=1 // pred_fallthru
      _
    %v49 = vld [vmem:[%s0] sm:$0xff]
    %v50 = vld [vmem:[%s0 + $0x8] sm:$0xff]
    %v51 = vmax.f32 %v49, 0.0
    %v52 = vmax.f32 %v50, 0.0
    %v53 = vand.u32 2147483647, %v49
    %v54 = vand.u32 2147483647, %v50
    %v55 = vsub.f32 0.0, %v53
    %v56 = vsub.f32 0.0, %v54
    %v57 = vmul.f32 %v55, 1.442695
    %v58 = vpow.pop %v57
    %v59 = vmul.f32 %v56, 1.442695
    %v60 = vpow.pop %v59
    %v61 = vadd.f32 %v58, 1.0
    %v62 = vadd.f32 %v60, 1.0
    %v63 = vlog2.pop %v61
    %v64 = vmul.f32 %v63, 0.6931472
    %v65 = vlog2.pop %v62
    %v66 = vmul.f32 %v65, 0.6931472
    %v67 = vadd.f32 %v51, %v64
    %v68 = vadd.f32 %v52, %v66
    %v69 = vmin.f32 %v67, 100.0
    %v70 = vmin.f32 %v68, 100.0
    %v71 = vld [vmem:[#allocation2] sm:$0x1]
    %v72 = vadd.f32 %v69, %v70
    %v73 = vrot.slane %v72, 4
    %v74 = vadd.f32 %v72, %v73
    %v75 = vrot.slane %v74, 2
    %v76 = vadd.f32 %v74, %v75
    %v77 = vrot.slane %v76, 1
    %v78 = vadd.f32 %v76, %v77
    %v79 = vadd.f32 %v71, %v78
    %80 = vst [vmem:[#allocation2] sm:$0x1] %v79
    // Predicated region
    $region42: #{tpu_custom_call.1} parent=1 // pred_check
      %p81 = pneg %p44
    $region43: #{tpu_custom_call.1} parent=1 // pred_check_branch
      %83 = sbr.rel (%p81) target = $region45
    $region44: #{tpu_custom_call.1} parent=1 // pred_region
      %v84 = vld [vmem:[#allocation2] sm:$0x1]
      %vm85 = vcmask 1040384
      %v86 = vsel %vm85, %v84, 0.0
      %87 = vadd.xlane.f32.xlu0 %v86
      %v88 = vpop.xlane.xlu0 %87
      %v89 = vrot.slane %v88, 4
      %v90 = vadd.f32 %v88, %v89
      %v91 = vrot.slane %v90, 2
      %v92 = vadd.f32 %v90, %v91
      %v93 = vrot.slane %v92, 1
      %v94 = vadd.f32 %v92, %v93
      %s95 = vtos %v94
      %v96 = vld [vmem:[%s3] sm:$0xf]
      %v97 = vld [vmem:[%s4] sm:$0xf]
      %v98 = vld [vmem:[%s5] sm:$0x1]
      %v99 = vmax.f32 %v96, 0.0
      %v100 = vand.u32 2147483647, %v96
      %v101 = vsub.f32 0.0, %v100
      %v102 = vmul.f32 %v101, 1.442695
      %v103 = vpow.pop %v102
      %v104 = vadd.f32 %v103, 1.0
      %v105 = vlog2.pop %v104
      %v106 = vmul.f32 %v105, 0.6931472
      %v107 = vadd.f32 %v99, %v106
      %v108 = vmin.f32 %v107, 100.0
      %v109 = vsub.f32 %v107, %v96
      %v110 = vmin.f32 %v109, 100.0
      %v111 = vmul.f32 %v97, %v110
      %v112 = vsub.f32 1.0, %v97
      %v113 = vmul.f32 %v112, %v108
      %v114 = vadd.f32 %v111, %v113
      %v115 = vmul.f32 %v114, 5.0
      %v116 = vsub.f32 %v115, %v108
      %v118 = vperm.slane %v98, 0
      %v120 = vmul.f32 %v116, %v118
      %vm121 = vcmask 1043456
      %v122 = vsel %vm121, %v120, 0.0
      %123 = vadd.xlane.f32.xlu0 %v122
      %v124 = vpop.xlane.xlu0 %123
      %v125 = vrot.slane %v124, 4
      %v126 = vadd.f32 %v124, %v125
      %v127 = vrot.slane %v126, 2
      %v128 = vadd.f32 %v126, %v127
      %v129 = vrot.slane %v128, 1
      %v130 = vadd.f32 %v128, %v129
      %s131 = vtos %v130
      %s132 = sadd.f32 %s95, %s131
      %s133 = smul.f32 %s132, 0.015625
      %v134 = vld [vmem:[%s1] sm:$0xff]
      %v135 = vld [vmem:[%s1 + $0x8] sm:$0xff]
      %vm136 = vcmask 23552
      %v137 = vsel %vm136, %v134, -inf
      %138 = vmax.xlane.f32.xlu0 %v137
      %v139 = vpop.xlane.xlu0 %138
      %v140 = vsel %vm136, %v135, -inf
      %141 = vmax.xlane.f32.xlu0 %v140
      %v142 = vpop.xlane.xlu0 %141
      %vm143 = vcmp.ge.f32.partialorder %v139, %v134
      %vm144 = vcmp.ge.f32.partialorder %v142, %v135
      %v145 = vsel %vm143, 1, 0
      %v146 = vsel %vm144, 1, 0
      %v147 = vcvt.s32.f32 %v145
      %v148 = vcvt.s32.f32 %v146
      %vm149 = vcmask 31768
      %v150 = vsel %vm149, %v147, 0.0
      %v151 = vrot.slane %v150, 4
      %v152 = vadd.f32 %v150, %v151
      %v153 = vrot.slane %v152, 2
      %v154 = vadd.f32 %v152, %v153
      %v155 = vrot.slane %v154, 1
      %v156 = vadd.f32 %v154, %v155
      %v157 = vsel %vm149, %v148, 0.0
      %v158 = vrot.slane %v157, 4
      %v159 = vadd.f32 %v157, %v158
      %v160 = vrot.slane %v159, 2
      %v161 = vadd.f32 %v159, %v160
      %v162 = vrot.slane %v161, 1
      %v163 = vadd.f32 %v161, %v162
      %v164 = vld [vmem:[%s2] sm:$0x3]
      %v166 = vrot.slane %v164, 1
      %167 = vrot.lane.b32.xlu0 %v164, 3
      %v168 = vpop.permute.xlu0 %167
      %169 = vrot.lane.b32.xlu0 %v166, 3
      %v170 = vpop.permute.xlu0 %169
      %v173 = vsub.f32 %v156, %v168
      %v174 = vsub.f32 %v163, %v170
      %v175 = vand.u32 2147483647, %v173
      %v176 = vand.u32 2147483647, %v174
      %v179 = vrot.slane %v176, 7
      %vm180 = vcmask 1041409
      %v181 = vsel %vm180, %v179, %v175
      %182 = vrot.lane.b32.xlu0 %v181, 125
      %v183 = vpop.permute.xlu0 %182
      %vm185 = vcmask 1024
      %v186 = vsel %vm185, %v183, 0.0
      %187 = vadd.xlane.f32.xlu0 %v186
      %v188 = vpop.xlane.xlu0 %187
      %v189 = vrot.slane %v188, 4
      %v190 = vadd.f32 %v188, %v189
      %v191 = vrot.slane %v190, 2
      %v192 = vadd.f32 %v190, %v191
      %v193 = vrot.slane %v192, 1
      %v194 = vadd.f32 %v192, %v193
      %s195 = vtos %v194
      %s196 = smul.f32 %s195, 0.5
      %v197 = vld [vmem:[%s6] sm:$0xf]
      %v198 = vld [vmem:[#allocation3] sm:$0xf]
      %v199 = vsub.f32 %v197, %v198
      %v200 = vand.u32 2147483647, %v199
      %v201 = vmul.f32 %v200, %v118
      %v202 = vsel %vm121, %v201, 0.0
      %203 = vadd.xlane.f32.xlu0 %v202
      %v204 = vpop.xlane.xlu0 %203
      %v205 = vrot.slane %v204, 4
      %v206 = vadd.f32 %v204, %v205
      %v207 = vrot.slane %v206, 2
      %v208 = vadd.f32 %v206, %v207
      %v209 = vrot.slane %v208, 1
      %v210 = vadd.f32 %v208, %v209
      %s211 = vtos %v210
      %s212 = smul.f32 %s211, 0.2
      %v213 = vmul.f32 %v197, 0.5
      %v215 = vrot.slane %v213, 2
      %v217 = vsub.f32 %v197, %v215
      %v218 = vadd.f32 %v197, %v215
      %v219 = vmul.f32 %v198, 0.5
      %v221 = vrot.slane %v219, 2
      %v223 = vsub.f32 %v198, %v221
      %v224 = vadd.f32 %v198, %v221
      %v225 = vsub.f32 %v218, %v217
      %v227 = vrot.slane %v225, 1
      %v229 = vmul.f32 %v225, %v227
      %v230 = vsub.f32 %v224, %v223
      %v232 = vrot.slane %v230, 1
      %v234 = vmul.f32 %v230, %v232
      %v235 = vmax.f32 %v217, %v223
      %v236 = vmin.f32 %v218, %v224
      %v237 = vsub.f32 %v236, %v235
      %v238 = vmax.f32 %v237, 0.0
      %v240 = vrot.slane %v238, 1
      %v242 = vmul.f32 %v238, %v240
      %v243 = vadd.f32 %v229, %v234
      %v244 = vsub.f32 %v243, %v242
      %v245 = vmax.f32 %v244, 1e-07
      %v246 = vrcp.pop %v245
      %v247 = vmul.f32 %v245, %v246
      %v248 = vsub.f32 1.0, %v247
      %v249 = vmul.f32 %v246, %v248
      %v250 = vadd.f32 %v246, %v249
      %vm251 = vweird.f32 %v245
      %vm252 = vweird.f32 %v246
      %vm253 = vmor %vm251, %vm252
      %v254 = vsel %vm253, %v246, %v250
      %v255 = vand.u32 2147483647, %v245
      %vm256 = vcmp.eq.f32.partialorder %v255, 8.507059e+37
      %v257 = vand.u32 %v245, 2147483648
      %v258 = vor.u32 1.1754944e-38, %v257
      %v259 = vsel %vm256, %v258, %v254
      %v260 = vmul.f32 %v242, %v259
      %v261 = vmin.f32 %v217, %v223
      %v262 = vmax.f32 %v218, %v224
      %v263 = vsub.f32 %v262, %v261
      %v265 = vrot.slane %v263, 1
      %v267 = vmul.f32 %v263, %v265
      %v268 = vsub.f32 %v267, %v244
      %v269 = vmax.f32 %v267, 1e-07
      %v270 = vrcp.pop %v269
      %v271 = vmul.f32 %v269, %v270
      %v272 = vsub.f32 1.0, %v271
      %v273 = vmul.f32 %v270, %v272
      %v274 = vadd.f32 %v270, %v273
      %vm275 = vweird.f32 %v269
      %vm276 = vweird.f32 %v270
      %vm277 = vmor %vm275, %vm276
      %v278 = vsel %vm277, %v270, %v274
      %v279 = vand.u32 2147483647, %v269
      %vm280 = vcmp.eq.f32.partialorder %v279, 8.507059e+37
      %v281 = vand.u32 %v269, 2147483648
      %v282 = vor.u32 1.1754944e-38, %v281
      %v283 = vsel %vm280, %v282, %v278
      %v284 = vmul.f32 %v268, %v283
      %v285 = vsub.f32 %v260, %v284
      %vm286 = vcmp.gt.f32.partialorder %v98, 0.0
      %v287 = vsub.f32 1.0, %v285
      %v288 = vsel %vm286, %v287, 0.0
      %v289 = vsel %vm85, %v288, 0.0
      %290 = vadd.xlane.f32.xlu0 %v289
      %v291 = vpop.xlane.xlu0 %290
      %v292 = vrot.slane %v291, 4
      %v293 = vadd.f32 %v291, %v292
      %v294 = vrot.slane %v293, 2
      %v295 = vadd.f32 %v293, %v294
      %v296 = vrot.slane %v295, 1
      %v297 = vadd.f32 %v295, %v296
      %s298 = vtos %v297
      %s299 = smul.f32 %s298, 0.2
      %v300 = vlaneseq
      %v301 = vand.u32 %v300, 127
      %vm302 = vcmp.eq.s32.totalorder %v301, 0
      %v303 = vstv %s133
      %v304 = vsel %vm302, %v303, 0.0
      %vm305 = vcmp.eq.s32.totalorder %v301, 1
      %v306 = vstv %s196
      %v307 = vsel %vm305, %v306, %v304
      %vm308 = vcmp.eq.s32.totalorder %v301, 2
      %v309 = vstv %s212
      %v310 = vsel %vm308, %v309, %v307
      %vm311 = vcmp.eq.s32.totalorder %v301, 3
      %v312 = vstv %s299
      %v313 = vsel %vm311, %v312, %v310
      %314 = vst [vmem:[#allocation6] sm:$0x1] %v313
    $region45: #{tpu_custom_call.1} parent=1 // pred_fallthru
      _
    // Predicated region
    $region46: #{tpu_custom_call.1} parent=1 // pred_check
      _
    $region47: #{tpu_custom_call.1} parent=1 // pred_check_branch
      %316 = sbr.rel (0) target = $region49
    $region48: #{tpu_custom_call.1} parent=1 // pred_region
      %318 = vsyncadd [#allocation5], 0
      %s320 = sshll.u32 [#allocation6], 4
      %s321 = int_to_ptr.vmem [resolvable:$true] %s320
      %s322 = sshll.u32 %s8, 4
      %s323 = int_to_ptr.hbm [resolvable:$true] %s322
      %325 = dma.vmem_to_hbm [thread:$0]  %s321, 16, %s323, [#allocation5]
    $region49: #{tpu_custom_call.1} parent=1 // pred_fallthru
      _
    // Predicated region
    $region50: #{tpu_custom_call.1} parent=1 // pred_check
      _
    $region51: #{tpu_custom_call.1} parent=1 // pred_check_branch
      %327 = sbr.rel (0) target = $region53
    $region52: #{tpu_custom_call.1} parent=1 // pred_region
      %329 = dma.done [#allocation5], 16
    $region53: #{tpu_custom_call.1} parent=1 // pred_fallthru
      _
    %330 = vsyncpa [#allocation4], 1
    %331 = vsyncpa [#allocation5], 1

</llo_original>
